<compile_context>
chip_gen: v7x
topology: tpu7x:2x2x1
jax: 0.10.0
libtpu: 0.0.40
codegen_flags: <defaults>
</compile_context>

<pallas_src>
import functools

import jax
import jax.numpy as jnp
from jax import lax
from jax.experimental import pallas as pl
from jax.experimental.pallas import tpu as pltpu


def _focal_loss_kernel(logits_ref, targets_ref, out_ref, *, alpha, gamma):
    logits = logits_ref[...].astype(jnp.float32)            # (TN, C)
    tgt = targets_ref[...]                                   # (TN, 1) int32
    tn, c = logits.shape

    # Numerically stable per-row cross entropy (the row max cancels in ce).
    row_max = jnp.max(logits, axis=-1, keepdims=True)        # (TN, 1)
    shifted = logits - row_max                                # (TN, C)
    lse = jnp.log(jnp.sum(jnp.exp(shifted), axis=-1, keepdims=True))  # (TN, 1)

    # Gather the target (shifted) logit with a one-hot mask (no dynamic gather).
    col_ids = lax.broadcasted_iota(jnp.int32, (tn, c), 1)
    onehot = col_ids == tgt
    tgt_shifted = jnp.sum(jnp.where(onehot, shifted, 0.0), axis=-1, keepdims=True)

    ce = jnp.maximum(lse - tgt_shifted, 0.0)                  # (TN, 1), CE >= 0
    pt = jnp.exp(-ce)
    one_m_pt = jnp.maximum(1.0 - pt, 0.0)

    g = float(gamma)
    if g == 0.0:
        w = jnp.ones_like(one_m_pt)
    elif g.is_integer() and 0.0 < g <= 8.0:                   # integer fast path
        w = one_m_pt
        for _ in range(int(g) - 1):
            w = w * one_m_pt
    else:
        w = one_m_pt ** g                                     # base already >= 0

    focal = alpha * w * ce                                    # (TN, 1)

    # Scatter the per-row column into a lane-dense (1, TN) output row, in
    # <=128-wide chunks: select the value on the diagonal and reduce sublanes.
    chunk = 128 if tn % 128 == 0 else tn
    i0 = lax.broadcasted_iota(jnp.int32, (chunk, chunk), 0)
    i1 = lax.broadcasted_iota(jnp.int32, (chunk, chunk), 1)
    eye = i0 == i1                                            # built once, reused
    for k in range(tn // chunk):                              # small static loop
        col_k = focal[k * chunk:(k + 1) * chunk, :]           # (chunk, 1)
        row_k = jnp.sum(jnp.where(eye, col_k, 0.0), axis=0, keepdims=True)
        out_ref[:, k * chunk:(k + 1) * chunk] = row_k


def _round_up(x, m):
    return ((x + m - 1) // m) * m


def _pick_tile_rows(n, c, itemsize):
    """Largest batch tile that keeps the double-buffered logits block modest."""
    if n <= 128:
        return _round_up(max(n, 1), 8)
    c_pad = _round_up(c, 128)
    budget = 8 * 1024 * 1024                  # logits double-buffer budget (bytes)
    tn = budget // (2 * c_pad * max(itemsize, 1))
    tn = max(128, min(1024, (tn // 128) * 128))
    return min(tn, _round_up(n, 128))


def focal_loss(inputs, targets, alpha=1.0, gamma=2.0, reduce=True, tile_rows=None):
    """Matches FocalLoss.forward (the `logits` flag has no effect, as in the module)."""
    n, c = inputs.shape
    itemsize = jnp.dtype(inputs.dtype).itemsize
    tn = _pick_tile_rows(n, c, itemsize) if tile_rows is None else int(tile_rows)
    assert tn % 8 == 0, "tile_rows must be a multiple of 8"
    num_tiles = pl.cdiv(n, tn)
    n_pad = num_tiles * tn

    logits = inputs                                    # keep native dtype in HBM
    targets2d = targets.astype(jnp.int32).reshape(n, 1)
    if n_pad != n:
        logits = jnp.pad(logits, ((0, n_pad - n), (0, 0)))
        targets2d = jnp.pad(targets2d, ((0, n_pad - n), (0, 0)))

    kernel = functools.partial(_focal_loss_kernel,
                               alpha=float(alpha), gamma=float(gamma))
    cost = pl.CostEstimate(
        flops=8 * n_pad * c,
        transcendentals=n_pad * c + 3 * n_pad,
        bytes_accessed=n_pad * c * itemsize + n_pad * 4 + n_pad * 4,
    )

    per_tile = pl.pallas_call(
        kernel,
        out_shape=jax.ShapeDtypeStruct((num_tiles, tn), jnp.float32),
        grid_spec=pltpu.PrefetchScalarGridSpec(
            num_scalar_prefetch=0,
            grid=(num_tiles,),
            in_specs=[
                pl.BlockSpec((tn, c), lambda i: (i, 0)),   # logits tile
                pl.BlockSpec((tn, 1), lambda i: (i, 0)),   # targets tile
            ],
            out_specs=pl.BlockSpec((1, tn), lambda i: (i, 0)),  # lane-dense out
        ),
        compiler_params=pltpu.CompilerParams(
            dimension_semantics=("parallel",),             # megacore on v7x
            vmem_limit_bytes=32 * 1024 * 1024,             # raise v5e's 16 MiB default
        ),
        cost_estimate=cost,
    )(logits, targets2d)

    per_sample = per_tile.reshape(-1)[:n]
    if reduce:
        return jnp.mean(per_sample)
    return per_sample


def _reference(inputs, targets, alpha=1.0, gamma=2.0, reduce=True):
    logp = jax.nn.log_softmax(inputs.astype(jnp.float32), axis=-1)
    ce = -jnp.take_along_axis(logp, targets[:, None].astype(jnp.int32), axis=-1)[:, 0]
    pt = jnp.exp(-ce)
    focal = alpha * (1.0 - pt) ** gamma * ce
    return jnp.mean(focal) if reduce else focal


if __name__ == "__main__":
    key = jax.random.PRNGKey(0)

    # Case 1: small single-tile batch, mean-reduced (module's typical use).
    k1, k2 = jax.random.split(key)
    n1, c1 = 8, 32
    x1 = jax.random.normal(k1, (n1, c1), dtype=jnp.float32)
    t1 = jax.random.randint(k2, (n1,), 0, c1, dtype=jnp.int32)
    out1 = jax.block_until_ready(focal_loss(x1, t1, alpha=1.0, gamma=2.0, reduce=True))
    ref1 = _reference(x1, t1, 1.0, 2.0, True)
    assert jnp.allclose(out1, ref1, atol=1e-5, rtol=1e-5), (out1, ref1)

    # Case 2: multi-tile grid with row padding, per-sample output (reduce=False).
    k3, k4 = jax.random.split(k2)
    n2, c2 = 200, 16
    x2 = jax.random.normal(k3, (n2, c2), dtype=jnp.float32)
    t2 = jax.random.randint(k4, (n2,), 0, c2, dtype=jnp.int32)
    out2 = jax.block_until_ready(
        focal_loss(x2, t2, alpha=0.5, gamma=2.0, reduce=False, tile_rows=64))
    ref2 = _reference(x2, t2, 0.5, 2.0, False)
    assert out2.shape == (n2,)
    assert jnp.allclose(out2, ref2, atol=1e-5, rtol=1e-5), (out2, ref2)

    # Case 3: bf16 logits DMA'd in native dtype (cast to f32 inside the kernel).
    x3 = x2.astype(jnp.bfloat16)
    out3 = jax.block_until_ready(focal_loss(x3, t2, alpha=1.0, gamma=2.0, reduce=True))
    ref3 = _reference(x3.astype(jnp.float32), t2, 1.0, 2.0, True)
    assert jnp.allclose(out3, ref3, atol=2e-3, rtol=2e-3), (out3, ref3)

    print("KERNEL_OK")
</pallas_src>

<mosaic_0001>
module attributes {stable_mosaic.version = 11 : i64} {
  func.func @_focal_loss_kernel(%arg0: i32, %arg1: memref<8x32xf32, #tpu.memory_space<vmem>>, %arg2: memref<8x1xi32, #tpu.memory_space<vmem>>, %arg3: memref<1x8xf32, #tpu.memory_space<vmem>>) attributes {dimension_semantics = [#tpu.dimension_semantics<parallel>], iteration_bounds = array<i64: 1>, scalar_prefetch = 0 : i64, scratch_operands = 0 : i64, tpu.core_type = #tpu.core_type<tc>, window_params = [{transform_indices = @transform_0, window_bounds = array<i64: 8, 32>}, {transform_indices = @transform_1, window_bounds = array<i64: 8, 1>}, {transform_indices = @transform_2, window_bounds = array<i64: 1, 8>}]} {
    %c0 = arith.constant 0 : index
    %c0_0 = arith.constant 0 : index
    %0 = vector.load %arg1[%c0, %c0_0] : memref<8x32xf32, #tpu.memory_space<vmem>>, vector<8x32xf32>
    %c0_1 = arith.constant 0 : index
    %c0_2 = arith.constant 0 : index
    %1 = vector.load %arg2[%c0_1, %c0_2] : memref<8x1xi32, #tpu.memory_space<vmem>>, vector<8x1xi32>
    %cst = arith.constant dense<0xFF800000> : vector<8xf32>
    %2 = vector.multi_reduction <maximumf>, %0, %cst [1] : vector<8x32xf32> to vector<8xf32>
    %3 = vector.shape_cast %2 : vector<8xf32> to vector<8x1xf32>
    %4 = vector.broadcast %3 : vector<8x1xf32> to vector<8x32xf32>
    %5 = arith.subf %0, %4 : vector<8x32xf32>
    %6 = math.exp %5 : vector<8x32xf32>
    %cst_3 = arith.constant dense<0.000000e+00> : vector<8xf32>
    %7 = vector.multi_reduction <add>, %6, %cst_3 [1] : vector<8x32xf32> to vector<8xf32>
    %8 = vector.shape_cast %7 : vector<8xf32> to vector<8x1xf32>
    %9 = math.log %8 : vector<8x1xf32>
    %10 = tpu.iota {dimensions = array<i32: 1>} : vector<8x32xi32>
    %11 = vector.broadcast %1 : vector<8x1xi32> to vector<8x32xi32>
    %12 = arith.cmpi eq, %10, %11 : vector<8x32xi32>
    %cst_4 = arith.constant 0.000000e+00 : f32
    %13 = vector.broadcast %cst_4 : f32 to vector<8x32xf32>
    %14 = arith.select %12, %5, %13 : vector<8x32xi1>, vector<8x32xf32>
    %cst_5 = arith.constant dense<0.000000e+00> : vector<8xf32>
    %15 = vector.multi_reduction <add>, %14, %cst_5 [1] : vector<8x32xf32> to vector<8xf32>
    %16 = vector.shape_cast %15 : vector<8xf32> to vector<8x1xf32>
    %17 = arith.subf %9, %16 : vector<8x1xf32>
    %cst_6 = arith.constant 0.000000e+00 : f32
    %18 = vector.broadcast %cst_6 : f32 to vector<8x1xf32>
    %19 = arith.maximumf %17, %18 : vector<8x1xf32>
    %cst_7 = arith.constant 0.000000e+00 : f32
    %20 = vector.broadcast %cst_7 : f32 to vector<8x1xf32>
    %21 = arith.subf %20, %19 : vector<8x1xf32>
    %22 = math.exp %21 : vector<8x1xf32>
    %cst_8 = arith.constant 1.000000e+00 : f32
    %23 = vector.broadcast %cst_8 : f32 to vector<8x1xf32>
    %24 = arith.subf %23, %22 : vector<8x1xf32>
    %cst_9 = arith.constant 0.000000e+00 : f32
    %25 = vector.broadcast %cst_9 : f32 to vector<8x1xf32>
    %26 = arith.maximumf %24, %25 : vector<8x1xf32>
    %27 = arith.mulf %26, %26 : vector<8x1xf32>
    %cst_10 = arith.constant 1.000000e+00 : f32
    %28 = vector.broadcast %cst_10 : f32 to vector<8x1xf32>
    %29 = arith.mulf %28, %27 : vector<8x1xf32>
    %30 = arith.mulf %29, %19 : vector<8x1xf32>
    %31 = tpu.iota {dimensions = array<i32: 0>} : vector<8x8xi32>
    %32 = tpu.iota {dimensions = array<i32: 1>} : vector<8x8xi32>
    %33 = arith.cmpi eq, %31, %32 : vector<8x8xi32>
    %cst_11 = arith.constant 0.000000e+00 : f32
    %34 = vector.shape_cast %30 : vector<8x1xf32> to vector<8x1xf32>
    %35 = vector.broadcast %34 : vector<8x1xf32> to vector<8x8xf32>
    %36 = vector.broadcast %cst_11 : f32 to vector<8x8xf32>
    %37 = arith.select %33, %35, %36 : vector<8x8xi1>, vector<8x8xf32>
    %cst_12 = arith.constant dense<0.000000e+00> : vector<8xf32>
    %38 = vector.multi_reduction <add>, %37, %cst_12 [0] : vector<8x8xf32> to vector<8xf32>
    %39 = vector.shape_cast %38 : vector<8xf32> to vector<1x8xf32>
    %c0_13 = arith.constant 0 : index
    %c0_14 = arith.constant 0 : index
    %40 = vector.load %arg3[%c0_13, %c0_14] : memref<1x8xf32, #tpu.memory_space<vmem>>, vector<1x8xf32>
    tpu.vector_store %arg3[%c0_13, %c0_14], %39 {strides = array<i32>} : memref<1x8xf32, #tpu.memory_space<vmem>>, vector<1x8xf32>,
    return
  }
  func.func @transform_0(%arg0: i32) -> (i32, i32) {
    %c0_i32 = arith.constant 0 : i32
    %c0_i32_0 = arith.constant 0 : i32
    return %arg0, %c0_i32 : i32, i32
  }
  func.func @transform_1(%arg0: i32) -> (i32, i32) {
    %c0_i32 = arith.constant 0 : i32
    %c0_i32_0 = arith.constant 0 : i32
    return %arg0, %c0_i32 : i32, i32
  }
  func.func @transform_2(%arg0: i32) -> (i32, i32) {
    %c0_i32 = arith.constant 0 : i32
    %c0_i32_0 = arith.constant 0 : i32
    return %arg0, %c0_i32 : i32, i32
  }
}

</mosaic_0001>

<llo_original>
// kernel: tpu_custom_call.1
$region0: #{tpu_custom_call.1}
  #allocation0 [shape = 'u32[]', space=smem, size = 0x4, offset = 0x4, fixed_abs, tag = 'smem constant byte address 0x4 - core index']
  #allocation1 [shape = 'u32[144,128]{1,0:T(1,128)}', space=vmem, size = 0x12000, scoped, tag = 'internal scratch']
  %s0 = inlined_call_operand.vmem [shape: f32[8,32], index: 0, kind: input, shape index: {}]
  %s1 = inlined_call_operand.vmem [shape: s32[8,1], index: 1, kind: input, shape index: {}]
  %s2 = inlined_call_operand.hbm [shape: f32[1,8], index: 2, kind: output, shape index: {}]
  %s3 = sld [smem:[#allocation0]]
  $region18: #{tpu_custom_call.1} parent=0
    _
  %s5 = ssub.s32 1, %s3
  %s6 = scalar_select 0, %s5, %s3
  $region1: #{tpu_custom_call.1} parent=0
    #allocation2 [shape = 'u8[512]{0}', space=vmem, size = 0x400, scoped, tag = 'output window, operand 0, single buffered']
    #allocation3 [shape = 's32[1]{0}', space=sflag, size = 0x4, scoped, tag = 'scoped memory for tpu_custom_call.1']
    %7 = vsyncpa [#allocation3], 0
    // Predicated region
    $region2: #{tpu_custom_call.1} parent=1 // pred_check
      _
    $region3: #{tpu_custom_call.1} parent=1 // pred_check_branch
      %9 = sbr.rel (0) target = $region5
    $region4: #{tpu_custom_call.1} parent=1 // pred_region
      _
    $region5: #{tpu_custom_call.1} parent=1 // pred_fallthru
      _
    // Predicated region
    $region6: #{tpu_custom_call.1} parent=1 // pred_check
      _
    $region7: #{tpu_custom_call.1} parent=1 // pred_check_branch
      %11 = sbr.rel (0) target = $region9
    $region8: #{tpu_custom_call.1} parent=1 // pred_region
      _
    $region9: #{tpu_custom_call.1} parent=1 // pred_fallthru
      _
    %v12 = vld [vmem:[%s0] sm:$0xff]
    %v13 = vld [vmem:[%s1] sm:$0xff]
    %vm14 = vcmask 261120
    %v15 = vsel %vm14, %v12, -inf
    %16 = vmax.xlane.f32.xlu0 %v15
    %v17 = vpop.xlane.xlu0 %16
    %v18 = vsub.f32 %v12, %v17
    %v19 = vmul.f32 %v18, 1.442695
    %v20 = vpow.pop %v19
    %v21 = vsel %vm14, %v20, 0.0
    %22 = vadd.xlane.f32.xlu0 %v21
    %v23 = vpop.xlane.xlu0 %22
    %v24 = vlog2.pop %v23
    %v25 = vmul.f32 %v24, 0.6931472
    %v26 = vlaneseq
    %v27 = vand.u32 %v26, 127
    %28 = vset.pattern.permute.xlu0 0
    %29 = vperm.xlu0 %28, %v13
    %v30 = vpop.permute.xlu0 %29
    %vm31 = vcmp.eq.s32.totalorder %v27, %v30
    %v32 = vsel %vm31, %v18, 0.0
    %v33 = vsel %vm14, %v32, 0.0
    %34 = vadd.xlane.f32.xlu0 %v33
    %v35 = vpop.xlane.xlu0 %34
    %v36 = vsub.f32 %v25, %v35
    %v37 = vmax.f32 %v36, 0.0
    %v38 = vsub.f32 0.0, %v37
    %v39 = vmul.f32 %v38, 1.442695
    %v40 = vpow.pop %v39
    %v41 = vsub.f32 1.0, %v40
    %v42 = vmax.f32 %v41, 0.0
    %v43 = vmul.f32 %v42, %v42
    %v44 = vmul.f32 %v43, %v37
    %v45 = vlaneseq
    %v46 = vshrl.u32 %v45, 7
    %vm47 = vcmp.eq.s32.totalorder %v46, %v27
    %v48 = vsel %vm47, %v44, 0.0
    %vm49 = vcmask 64512
    %v50 = vsel %vm49, %v48, 0.0
    %v51 = vrot.slane %v50, 4
    %v52 = vadd.f32 %v50, %v51
    %v53 = vrot.slane %v52, 2
    %v54 = vadd.f32 %v52, %v53
    %v55 = vrot.slane %v54, 1
    %v56 = vadd.f32 %v54, %v55
    %vm57 = vcmask 57344
    %58 = vst.msk [vmem:[#allocation2] sm:$0x1] %vm57, %v56
    // Predicated region
    $region10: #{tpu_custom_call.1} parent=1 // pred_check
      _
    $region11: #{tpu_custom_call.1} parent=1 // pred_check_branch
      %60 = sbr.rel (0) target = $region13
    $region12: #{tpu_custom_call.1} parent=1 // pred_region
      %s62 = ssub.s32 16, 16
      %63 = vsyncadd [#allocation3], %s62
      %s65 = sshll.u32 [#allocation2], 4
      %s66 = int_to_ptr.vmem [resolvable:$true] %s65
      %68 = dma.vmem_to_hbm [thread:$0]  %s66, 16, %s2, [#allocation3]
    $region13: #{tpu_custom_call.1} parent=1 // pred_fallthru
      _
    // Predicated region
    $region14: #{tpu_custom_call.1} parent=1 // pred_check
      _
    $region15: #{tpu_custom_call.1} parent=1 // pred_check_branch
      %70 = sbr.rel (0) target = $region17
    $region16: #{tpu_custom_call.1} parent=1 // pred_region
      %71 = dma.done [#allocation3], 16
    $region17: #{tpu_custom_call.1} parent=1 // pred_fallthru
      _
    %72 = vsyncpa [#allocation3], 1

</llo_original>
